<compile_context>
chip_gen: v7x
topology: tpu7x:2x2x1
jax: 0.10.0
libtpu: 0.0.40
codegen_flags: <defaults>
</compile_context>

<pallas_src>
import functools

import jax
import jax.numpy as jnp
from jax import lax
from jax.experimental import pallas as pl
from jax.experimental.pallas import tpu as pltpu

ALPHA = 0.17
IGNORE_INDEX = -100
MSE_CLAMP_MAX = 160.0      # matches the reference module's clamp(max=160.0)
_OUT_LANES = 128           # lanes 0..2 of the output hold (ce_num, ce_den, mse_sum)


def _ce_mse_kernel(logits_ref, targets_ref, weight_ref, out_ref, carry_ref,
                   *, seq_len, tile_s):
    t = pl.program_id(1)

    # Per-tile relayout: (tile_s, C) native block -> f32 (C, tile_s).  The transpose runs
    # on the XLU slot (not the binding VALU slot) and replaces a full HBM transpose pass.
    x = jnp.transpose(logits_ref[0].astype(jnp.float32))          # (C, T)
    C, T = x.shape

    # log-softmax over the class (sublane) axis.  Padded-tail columns of the last ragged
    # tile may hold garbage/NaN; they stay column-local and every later use sits behind a
    # select, so no pre-masking of x is needed.
    m = jnp.max(x, axis=0, keepdims=True)
    z = x - m
    lse = jnp.log(jnp.sum(jnp.exp(z), axis=0, keepdims=True))
    logp = z - lse                                                # (C, T) f32

    # Previous-frame tensor: lane-roll by one (XLU) and splice the cross-tile carry into
    # lane 0.  At t == 0 the splice uses this tile's own first column, so the (nonexistent)
    # boundary diff contributes exactly zero; carry garbage at t == 0 is select-discarded.
    lane = lax.broadcasted_iota(jnp.int32, (1, T), 1)
    prev0 = jnp.where(t > 0, carry_ref[...], logp[:, 0:1])        # (C, 1)
    prev = pltpu.roll(logp, shift=1, axis=1)
    prev = jnp.where(lane == 0, prev0, prev)
    d = logp - prev
    sq = jnp.minimum(d * d, MSE_CLAMP_MAX)                        # clamp(min=0) no-op on squares

    # Carry for the next tile of this batch row (never read after the last tile).
    carry_ref[...] = logp[:, T - 1:T]

    # One-hot of targets: (C,1) class iota vs (1,T) targets (ignore_index=-100 never hits).
    tgt = targets_ref[0]                                          # (1, T) int32
    cls = lax.broadcasted_iota(jnp.int32, (C, 1), 0)
    hit = cls == tgt                                              # (C, T) bool
    w_col = weight_ref[...]                                       # (C, 1) f32

    def _sums(mask_tail):
        if mask_tail:
            valid = lane < (seq_len - t * tile_s)                 # (1, T)
            h = jnp.logical_and(hit, valid)
            ce_num = -jnp.sum(jnp.where(h, w_col * logp, 0.0))
            ce_den = jnp.sum(jnp.where(h, w_col, 0.0))
            mse = jnp.sum(jnp.where(valid, sq, 0.0))
        else:
            ce_num = -jnp.sum(jnp.where(hit, w_col * logp, 0.0))
            ce_den = jnp.sum(jnp.where(hit, w_col, 0.0))
            mse = jnp.sum(sq)
        return ce_num, ce_den, mse

    if seq_len % tile_s:
        # Only the last tile pays for tail masking; interior tiles take the cheap path.
        ce_num, ce_den, mse = lax.cond(t == pl.num_programs(1) - 1,
                                       lambda: _sums(True),
                                       lambda: _sums(False))
    else:
        ce_num, ce_den, mse = _sums(False)

    # Pack the three partial sums into lanes 0..2 of the per-batch accumulator row.
    out_lane = lax.broadcasted_iota(jnp.int32, (1, 1, _OUT_LANES), 2)
    partial = (jnp.where(out_lane == 0, ce_num, 0.0)
               + jnp.where(out_lane == 1, ce_den, 0.0)
               + jnp.where(out_lane == 2, mse, 0.0))

    @pl.when(t == 0)
    def _():
        out_ref[...] = jnp.zeros_like(out_ref)

    out_ref[...] += partial


def _pick_tile_s(seq_len, num_classes, itemsize, tile_budget_bytes):
    """Largest lane-aligned time-tile whose live VMEM footprint fits the budget."""
    lane_pad = ((num_classes + 127) // 128) * 128   # lane padding of the raw (tile_s, C) block
    sub_pad = ((num_classes + 7) // 8) * 8          # sublane padding after the in-kernel transpose
    # Per time-step bytes: double-buffered native-dtype input block (C padded to 128 lanes)
    # + one f32 pre-transpose copy + ~8 f32 (C, tile) intermediates (logp, prev, sq, selects).
    bytes_per_step = lane_pad * (2 * itemsize + 4) + 8 * sub_pad * 4
    tile = tile_budget_bytes // bytes_per_step
    tile = max(128, (tile // 128) * 128)
    tile = min(tile, 1 << 15)
    return int(min(tile, seq_len))


def ce_plus_mse_loss(logits, targets, weight, alpha=ALPHA, tile_s=None):
    """logits: [B, S, C] (any float dtype), targets: [B, S] int, weight: [C] float."""
    B, S, C = logits.shape
    itemsize = jnp.dtype(logits.dtype).itemsize

    targets3 = targets.astype(jnp.int32).reshape(B, 1, S)
    weight2 = weight.astype(jnp.float32).reshape(C, 1)

    # VMEM budget from the actual chip (v7x has only 64 MiB per TensorCore).
    try:
        vmem_cap = int(getattr(pltpu.get_tpu_info(), "vmem_capacity_bytes", 64 << 20))
    except Exception:
        vmem_cap = 64 << 20
    vmem_limit = int(min(48 << 20, max(16 << 20, vmem_cap // 2)))

    if tile_s is None:
        tile_s = _pick_tile_s(S, C, itemsize, (vmem_limit * 3) // 5)
    tile_s = min(int(tile_s), S)
    n_tiles = pl.cdiv(S, tile_s)

    kernel = functools.partial(_ce_mse_kernel, seq_len=S, tile_s=tile_s)

    partials = pl.pallas_call(
        kernel,
        grid=(B, n_tiles),
        in_specs=[
            pl.BlockSpec((1, tile_s, C), lambda b, s: (b, s, 0)),   # native [B,S,C] layout
            pl.BlockSpec((1, 1, tile_s), lambda b, s: (b, 0, s)),
            pl.BlockSpec((C, 1), lambda b, s: (0, 0)),
        ],
        out_specs=pl.BlockSpec((1, 1, _OUT_LANES), lambda b, s: (b, 0, 0)),
        out_shape=jax.ShapeDtypeStruct((B, 1, _OUT_LANES), jnp.float32),
        scratch_shapes=[pltpu.VMEM((C, 1), jnp.float32)],
        compiler_params=pltpu.CompilerParams(
            dimension_semantics=("parallel", "arbitrary"),
            vmem_limit_bytes=vmem_limit),
    )(logits, targets3, weight2)

    totals = jnp.sum(partials, axis=(0, 1))                        # (128,)
    ce_num, ce_den, mse_sum = totals[0], totals[1], totals[2]

    loss_ce = ce_num / ce_den                                      # NaN if all frames ignored (matches torch)
    loss_mse = mse_sum / jnp.float32(B * C * (S - 1))              # S == 1 -> NaN (mean of empty, matches torch)
    loss_total = loss_ce + alpha * loss_mse
    return {"loss_ce": loss_ce, "loss_mse": loss_mse, "loss_total": loss_total}


def _reference_loss(logits, targets, weight, alpha=ALPHA):
    """Pure-JAX reference mirroring the PyTorch module's forward."""
    logp = jax.nn.log_softmax(logits.astype(jnp.float32), axis=-1)  # (B, S, C)
    valid = (targets != IGNORE_INDEX)
    t_safe = jnp.where(valid, targets, 0)
    picked = jnp.take_along_axis(logp, t_safe[..., None], axis=-1)[..., 0]  # (B, S)
    w_t = weight[t_safe] * valid.astype(jnp.float32)
    loss_ce = -jnp.sum(w_t * picked) / jnp.sum(w_t)
    d = logp[:, 1:, :] - logp[:, :-1, :]
    loss_mse = jnp.mean(jnp.minimum(d * d, MSE_CLAMP_MAX))
    return {"loss_ce": loss_ce, "loss_mse": loss_mse,
            "loss_total": loss_ce + alpha * loss_mse}


if __name__ == "__main__":
    key = jax.random.PRNGKey(0)
    k1, k2, k3, k4 = jax.random.split(key, 4)

    # --- Case 1: single tile per batch row, f32 input, C a multiple of 8 ---
    B, S, C = 2, 256, 8
    logits = jax.random.normal(k1, (B, S, C), dtype=jnp.float32) * 2.0
    targets = jax.random.randint(k2, (B, S), 0, C, dtype=jnp.int32)
    targets = targets.at[0, 3].set(IGNORE_INDEX)          # exercise ignore_index
    weight = 1.0 + 0.1 * jnp.arange(C, dtype=jnp.float32)

    out = ce_plus_mse_loss(logits, targets, weight, ALPHA)
    jax.block_until_ready(out)
    ref = _reference_loss(logits, targets, weight, ALPHA)
    for name in ("loss_ce", "loss_mse", "loss_total"):
        assert jnp.allclose(out[name], ref[name], rtol=1e-4, atol=1e-5), (
            name, out[name], ref[name])

    # --- Case 2: multi-tile sequence with ragged tail, odd C, bf16 input ---
    B2, S2, C2 = 2, 300, 10
    logits2 = (jax.random.normal(k3, (B2, S2, C2), dtype=jnp.float32) * 2.0
               ).astype(jnp.bfloat16)
    targets2 = jax.random.randint(k4, (B2, S2), 0, C2, dtype=jnp.int32)
    targets2 = targets2.at[1, 7].set(IGNORE_INDEX)
    weight2 = 0.5 + 0.05 * jnp.arange(C2, dtype=jnp.float32)

    out2 = ce_plus_mse_loss(logits2, targets2, weight2, ALPHA, tile_s=128)
    jax.block_until_ready(out2)
    ref2 = _reference_loss(logits2, targets2, weight2, ALPHA)
    for name in ("loss_ce", "loss_mse", "loss_total"):
        assert jnp.allclose(out2[name], ref2[name], rtol=1e-3, atol=1e-4), (
            name, out2[name], ref2[name])

    print("KERNEL_OK")
</pallas_src>

<mosaic_0001>
module attributes {stable_mosaic.version = 11 : i64} {
  func.func @_ce_mse_kernel(%arg0: i32, %arg1: i32, %arg2: memref<1x256x8xf32, #tpu.memory_space<vmem>>, %arg3: memref<1x1x256xi32, #tpu.memory_space<vmem>>, %arg4: memref<8x1xf32, #tpu.memory_space<vmem>>, %arg5: memref<1x1x128xf32, #tpu.memory_space<vmem>>, %arg6: memref<8x1xf32, #tpu.memory_space<vmem>>) attributes {dimension_semantics = [#tpu.dimension_semantics<parallel>, #tpu.dimension_semantics<arbitrary>], iteration_bounds = array<i64: 2, 1>, scalar_prefetch = 0 : i64, scratch_operands = 1 : i64, tpu.core_type = #tpu.core_type<tc>, window_params = [{transform_indices = @transform_0, window_bounds = array<i64: 1, 256, 8>}, {transform_indices = @transform_1, window_bounds = array<i64: 1, 1, 256>}, {pipeline_mode = #tpu.pipeline_mode<synchronous>, transform_indices = @transform_2, window_bounds = array<i64: 8, 1>}, {transform_indices = @transform_3, window_bounds = array<i64: 1, 1, 128>}]} {
    %c0 = arith.constant 0 : index
    %c0_0 = arith.constant 0 : index
    %c0_1 = arith.constant 0 : index
    %0 = vector.load %arg2[%c0, %c0_0, %c0_1] : memref<1x256x8xf32, #tpu.memory_space<vmem>>, vector<1x256x8xf32>
    %1 = vector.shape_cast %0 : vector<1x256x8xf32> to vector<256x8xf32>
    %2 = tpu.transpose %1, [1, 0] : vector<256x8xf32> -> vector<8x256xf32>
    %cst = arith.constant dense<0xFF800000> : vector<256xf32>
    %3 = vector.multi_reduction <maximumf>, %2, %cst [0] : vector<8x256xf32> to vector<256xf32>
    %4 = vector.shape_cast %3 : vector<256xf32> to vector<1x256xf32>
    %5 = vector.broadcast %4 : vector<1x256xf32> to vector<8x256xf32>
    %6 = arith.subf %2, %5 : vector<8x256xf32>
    %7 = math.exp %6 : vector<8x256xf32>
    %cst_2 = arith.constant dense<0.000000e+00> : vector<256xf32>
    %8 = vector.multi_reduction <add>, %7, %cst_2 [0] : vector<8x256xf32> to vector<256xf32>
    %9 = vector.shape_cast %8 : vector<256xf32> to vector<1x256xf32>
    %10 = math.log %9 : vector<1x256xf32>
    %11 = vector.broadcast %10 : vector<1x256xf32> to vector<8x256xf32>
    %12 = arith.subf %6, %11 : vector<8x256xf32>
    %13 = tpu.iota {dimensions = array<i32: 1>} : vector<1x256xi32>
    %c0_i32 = arith.constant 0 : i32
    %14 = arith.cmpi sgt, %arg1, %c0_i32 : i32
    %c0_3 = arith.constant 0 : index
    %c0_4 = arith.constant 0 : index
    %15 = vector.load %arg6[%c0_3, %c0_4] : memref<8x1xf32, #tpu.memory_space<vmem>>, vector<8x1xf32>
    %16 = vector.extract_strided_slice %12 {offsets = [0, 0], sizes = [8, 1], strides = [1, 1]} : vector<8x256xf32> to vector<8x1xf32>
    %17 = arith.select %14, %15, %16 : vector<8x1xf32>
    %c1_i32 = arith.constant 1 : i32
    %18 = tpu.dynamic_rotate %12 by %c1_i32 dim 1 : vector<8x256xf32>, i32 -> vector<8x256xf32>
    %c0_i32_5 = arith.constant 0 : i32
    %19 = vector.broadcast %c0_i32_5 : i32 to vector<1x256xi32>
    %20 = arith.cmpi eq, %13, %19 : vector<1x256xi32>
    %21 = vector.shape_cast %20 : vector<1x256xi1> to vector<1x256xi1>
    %22 = vector.broadcast %21 : vector<1x256xi1> to vector<8x256xi1>
    %23 = vector.shape_cast %17 : vector<8x1xf32> to vector<8x1xf32>
    %24 = vector.broadcast %23 : vector<8x1xf32> to vector<8x256xf32>
    %25 = arith.select %22, %24, %18 : vector<8x256xi1>, vector<8x256xf32>
    %26 = arith.subf %12, %25 : vector<8x256xf32>
    %27 = arith.mulf %26, %26 : vector<8x256xf32>
    %cst_6 = arith.constant 1.600000e+02 : f32
    %28 = vector.broadcast %cst_6 : f32 to vector<8x256xf32>
    %29 = arith.minimumf %27, %28 : vector<8x256xf32>
    %30 = vector.extract_strided_slice %12 {offsets = [0, 255], sizes = [8, 1], strides = [1, 1]} : vector<8x256xf32> to vector<8x1xf32>
    %c0_7 = arith.constant 0 : index
    %c0_8 = arith.constant 0 : index
    %31 = vector.load %arg6[%c0_7, %c0_8] : memref<8x1xf32, #tpu.memory_space<vmem>>, vector<8x1xf32>
    tpu.vector_store %arg6[%c0_7, %c0_8], %30 {strides = array<i32>} : memref<8x1xf32, #tpu.memory_space<vmem>>, vector<8x1xf32>,
    %c0_9 = arith.constant 0 : index
    %c0_10 = arith.constant 0 : index
    %c0_11 = arith.constant 0 : index
    %32 = vector.load %arg3[%c0_9, %c0_10, %c0_11] : memref<1x1x256xi32, #tpu.memory_space<vmem>>, vector<1x1x256xi32>
    %33 = vector.shape_cast %32 : vector<1x1x256xi32> to vector<1x256xi32>
    %34 = tpu.iota {dimensions = array<i32: 0>} : vector<8x1xi32>
    %35 = vector.broadcast %34 : vector<8x1xi32> to vector<8x256xi32>
    %36 = vector.broadcast %33 : vector<1x256xi32> to vector<8x256xi32>
    %37 = arith.cmpi eq, %35, %36 : vector<8x256xi32>
    %c0_12 = arith.constant 0 : index
    %c0_13 = arith.constant 0 : index
    %38 = vector.load %arg4[%c0_12, %c0_13] : memref<8x1xf32, #tpu.memory_space<vmem>>, vector<8x1xf32>
    %39 = vector.broadcast %38 : vector<8x1xf32> to vector<8x256xf32>
    %40 = arith.mulf %39, %12 : vector<8x256xf32>
    %cst_14 = arith.constant 0.000000e+00 : f32
    %41 = vector.broadcast %cst_14 : f32 to vector<8x256xf32>
    %42 = arith.select %37, %40, %41 : vector<8x256xi1>, vector<8x256xf32>
    %43 = vector.shape_cast %42 : vector<8x256xf32> to vector<1x8x256xf32>
    %cst_15 = arith.constant dense<0.000000e+00> : vector<1xf32>
    %44 = vector.multi_reduction <add>, %43, %cst_15 [1, 2] : vector<1x8x256xf32> to vector<1xf32>
    %45 = vector.shape_cast %44 : vector<1xf32> to vector<1x1x1xf32>
    %46 = vector.extract %45[0, 0, 0] : f32 from vector<1x1x1xf32>
    %cst_16 = arith.constant 0.000000e+00 : f32
    %47 = arith.subf %cst_16, %46 : f32
    %cst_17 = arith.constant 0.000000e+00 : f32
    %48 = vector.shape_cast %38 : vector<8x1xf32> to vector<8x1xf32>
    %49 = vector.broadcast %48 : vector<8x1xf32> to vector<8x256xf32>
    %50 = vector.broadcast %cst_17 : f32 to vector<8x256xf32>
    %51 = arith.select %37, %49, %50 : vector<8x256xi1>, vector<8x256xf32>
    %52 = vector.shape_cast %51 : vector<8x256xf32> to vector<1x8x256xf32>
    %cst_18 = arith.constant dense<0.000000e+00> : vector<1xf32>
    %53 = vector.multi_reduction <add>, %52, %cst_18 [1, 2] : vector<1x8x256xf32> to vector<1xf32>
    %54 = vector.shape_cast %53 : vector<1xf32> to vector<1x1x1xf32>
    %55 = vector.extract %54[0, 0, 0] : f32 from vector<1x1x1xf32>
    %56 = vector.shape_cast %29 : vector<8x256xf32> to vector<1x8x256xf32>
    %cst_19 = arith.constant dense<0.000000e+00> : vector<1xf32>
    %57 = vector.multi_reduction <add>, %56, %cst_19 [1, 2] : vector<1x8x256xf32> to vector<1xf32>
    %58 = vector.shape_cast %57 : vector<1xf32> to vector<1x1x1xf32>
    %59 = vector.extract %58[0, 0, 0] : f32 from vector<1x1x1xf32>
    %60 = tpu.iota {dimensions = array<i32: 2>} : vector<1x1x128xi32>
    %c0_i32_20 = arith.constant 0 : i32
    %61 = vector.broadcast %c0_i32_20 : i32 to vector<1x1x128xi32>
    %62 = arith.cmpi eq, %60, %61 : vector<1x1x128xi32>
    %cst_21 = arith.constant 0.000000e+00 : f32
    %63 = vector.broadcast %47 : f32 to vector<1x1x128xf32>
    %64 = vector.broadcast %cst_21 : f32 to vector<1x1x128xf32>
    %65 = arith.select %62, %63, %64 : vector<1x1x128xi1>, vector<1x1x128xf32>
    %c1_i32_22 = arith.constant 1 : i32
    %66 = vector.broadcast %c1_i32_22 : i32 to vector<1x1x128xi32>
    %67 = arith.cmpi eq, %60, %66 : vector<1x1x128xi32>
    %cst_23 = arith.constant 0.000000e+00 : f32
    %68 = vector.broadcast %55 : f32 to vector<1x1x128xf32>
    %69 = vector.broadcast %cst_23 : f32 to vector<1x1x128xf32>
    %70 = arith.select %67, %68, %69 : vector<1x1x128xi1>, vector<1x1x128xf32>
    %71 = arith.addf %65, %70 : vector<1x1x128xf32>
    %c2_i32 = arith.constant 2 : i32
    %72 = vector.broadcast %c2_i32 : i32 to vector<1x1x128xi32>
    %73 = arith.cmpi eq, %60, %72 : vector<1x1x128xi32>
    %cst_24 = arith.constant 0.000000e+00 : f32
    %74 = vector.broadcast %59 : f32 to vector<1x1x128xf32>
    %75 = vector.broadcast %cst_24 : f32 to vector<1x1x128xf32>
    %76 = arith.select %73, %74, %75 : vector<1x1x128xi1>, vector<1x1x128xf32>
    %77 = arith.addf %71, %76 : vector<1x1x128xf32>
    %c0_i32_25 = arith.constant 0 : i32
    %78 = arith.cmpi eq, %arg1, %c0_i32_25 : i32
    %79 = arith.extui %78 : i1 to i32
    %c0_i32_26 = arith.constant 0 : i32
    %80 = arith.cmpi ne, %79, %c0_i32_26 : i32
    scf.if %80 {
      %cst_33 = arith.constant 0.000000e+00 : f32
      %84 = vector.broadcast %cst_33 : f32 to vector<1x1x128xf32>
      %c0_34 = arith.constant 0 : index
      %c0_35 = arith.constant 0 : index
      %c0_36 = arith.constant 0 : index
      %85 = vector.load %arg5[%c0_34, %c0_35, %c0_36] : memref<1x1x128xf32, #tpu.memory_space<vmem>>, vector<1x1x128xf32>
      tpu.vector_store %arg5[%c0_34, %c0_35, %c0_36], %84 {strides = array<i32>} : memref<1x1x128xf32, #tpu.memory_space<vmem>>, vector<1x1x128xf32>,
    } else {
    }
    %c0_27 = arith.constant 0 : index
    %c0_28 = arith.constant 0 : index
    %c0_29 = arith.constant 0 : index
    %81 = vector.load %arg5[%c0_27, %c0_28, %c0_29] : memref<1x1x128xf32, #tpu.memory_space<vmem>>, vector<1x1x128xf32>
    %82 = arith.addf %81, %77 : vector<1x1x128xf32>
    %c0_30 = arith.constant 0 : index
    %c0_31 = arith.constant 0 : index
    %c0_32 = arith.constant 0 : index
    %83 = vector.load %arg5[%c0_30, %c0_31, %c0_32] : memref<1x1x128xf32, #tpu.memory_space<vmem>>, vector<1x1x128xf32>
    tpu.vector_store %arg5[%c0_30, %c0_31, %c0_32], %82 {strides = array<i32>} : memref<1x1x128xf32, #tpu.memory_space<vmem>>, vector<1x1x128xf32>,
    return
  }
  func.func @transform_0(%arg0: i32, %arg1: i32) -> (i32, i32, i32) {
    %c0_i32 = arith.constant 0 : i32
    %c0_i32_0 = arith.constant 0 : i32
    return %arg0, %arg1, %c0_i32 : i32, i32, i32
  }
  func.func @transform_1(%arg0: i32, %arg1: i32) -> (i32, i32, i32) {
    %c0_i32 = arith.constant 0 : i32
    %c0_i32_0 = arith.constant 0 : i32
    return %arg0, %c0_i32, %arg1 : i32, i32, i32
  }
  func.func @transform_2(%arg0: i32, %arg1: i32) -> (i32, i32) {
    %c0_i32 = arith.constant 0 : i32
    %c0_i32_0 = arith.constant 0 : i32
    %c0_i32_1 = arith.constant 0 : i32
    return %c0_i32, %c0_i32_0 : i32, i32
  }
  func.func @transform_3(%arg0: i32, %arg1: i32) -> (i32, i32, i32) {
    %c0_i32 = arith.constant 0 : i32
    %c0_i32_0 = arith.constant 0 : i32
    %c0_i32_1 = arith.constant 0 : i32
    return %arg0, %c0_i32, %c0_i32_0 : i32, i32, i32
  }
}

</mosaic_0001>

<llo_original>
// kernel: tpu_custom_call.1
$region0: #{tpu_custom_call.1}
  #allocation0 [shape = 'u32[]', space=smem, size = 0x4, offset = 0x4, fixed_abs, tag = 'smem constant byte address 0x4 - core index']
  #allocation1 [shape = 'u32[144,128]{1,0:T(1,128)}', space=vmem, size = 0x12000, scoped, tag = 'internal scratch']
  #allocation2 [shape = 'f32[8,1]{1,0:T(8,128)}', space=vmem, size = 0x1000, scoped, tag = 'scratch operand']
  %s0 = inlined_call_operand.vmem [shape: f32[2,256,8], index: 0, kind: input, shape index: {}]
  %s1 = inlined_call_operand.vmem [shape: s32[2,1,256], index: 1, kind: input, shape index: {}]
  %s2 = inlined_call_operand.vmem [shape: f32[8,1], index: 2, kind: input, shape index: {}]
  %s3 = inlined_call_operand.hbm [shape: f32[2,1,128], index: 3, kind: output, shape index: {}]
  %s4 = sld [smem:[#allocation0]]
  $region49: #{tpu_custom_call.1} parent=0
    _
  %s6 = ssub.s32 1, %s4
  %s7 = scalar_select 0, %s6, %s4
  $region1: #{tpu_custom_call.1} parent=0
    #allocation3 [shape = 'u8[1024]{0}', space=vmem, size = 0x400, scoped, tag = 'output window, operand 0']
    #allocation4 [shape = 's32[2]{0}', space=sflag, size = 0x8, scoped, tag = 'scoped memory for tpu_custom_call.1']
    %8 = vsyncpa [#allocation4], 0
    %s9 = scalar_lea.sflag [#allocation4], 1
    %10 = vsyncpa %s9, 0
    loop: start=0, step=1, limit=4
    $region2: #{tpu_custom_call.1} parent=1 // loop_pre_header
      _
    $region3: #{tpu_custom_call.1} parent=1 // loop_header
      %s12 = sphi 0, %s16
      %p13 = scmp.ge.s32.totalorder %s12, 4
      %s19 = sphi 0, %s31
      %s20 = sphi 0, %s27
      %s21 = sphi 0, %s19
      %s22 = sphi 0, %s20
      %s23 = sphi 0, %s21
      %s24 = sphi 0, %s22
      %s36 = sphi 0, %s38
      %s39 = sphi 0, %s36
      %s40 = sphi 0, %s39
      %s56 = sphi 0, %s40
      %s64 = sphi 0, %s66
      %s67 = sphi 0, %s64
      %s68 = sphi 0, %s67
      %s84 = sphi 0, %s68
      %s88 = sphi 0, %s88
      %s90 = sphi 0, %s88
      %s91 = sphi 0, %s90
      %s105 = sphi 0, %s91
      %s111 = sphi 0, %s113
      %s114 = sphi 0, %s111
      %s115 = sphi 0, %s114
      %s131 = sphi 0, %s115
    $region4: #{tpu_custom_call.1} parent=1 // loop_header_branch
      %15 = sbr.rel (%p13) target = $region8
    $region5: #{tpu_custom_call.1} parent=1 // loop_body
      %s17 = ssub.s32 %s12, 1
      %s18 = ssub.s32 %s12, 2
      %s25 = sadd.s32 1, %s20
      %p26 = scmp.ge.s32.totalorder %s25, 1
      %s27 = scalar_select %p26, 0, %s25
      %s28 = sadd.s32 1, %s19
      %s29 = scalar_select %p26, %s28, %s19
      %p30 = scmp.ge.s32.totalorder %s29, 2
      %s31 = scalar_select %p30, 0, %s29
      %s32 = ssub.s32 %s19, %s31
      %s33 = ssub.s32 %s20, %s27
      %s34 = sor.u32 %s32, %s33
      %p35 = scmp.eq.s32.totalorder %s34, 0
      %s37 = sadd.s32 %s36, 1
      %s38 = scalar_select %p35, %s36, %s37
      %p41 = pneg %p35
      %p42 = scmp.eq.s32.totalorder %s12, 1
      %p43 = por %p41, %p42
      %p44 = scmp.ne.s32.totalorder %s36, %s39
      %p45 = scmp.eq.s32.totalorder %s12, 0
      %p46 = por %p44, %p45
      %p47 = scmp.ne.s32.totalorder %s36, %s39
      %p48 = scmp.eq.s32.totalorder %s17, 1
      %p49 = por %p47, %p48
      %p50 = scmp.ne.s32.totalorder %s39, %s40
      %p51 = scmp.eq.s32.totalorder %s17, 0
      %p52 = por %p50, %p51
      %p53 = scmp.ne.s32.totalorder %s39, %s40
      %p54 = scmp.eq.s32.totalorder %s18, 1
      %p55 = por %p53, %p54
      %p57 = scmp.ne.s32.totalorder %s40, %s56
      %p58 = scmp.eq.s32.totalorder %s18, 0
      %p59 = por %p57, %p58
      %s60 = ssub.s32 %s19, %s31
      %s61 = ssub.s32 %s20, %s27
      %s62 = sor.u32 %s60, %s61
      %p63 = scmp.eq.s32.totalorder %s62, 0
      %s65 = sadd.s32 %s64, 1
      %s66 = scalar_select %p63, %s64, %s65
      %p69 = pneg %p63
      %p70 = scmp.eq.s32.totalorder %s12, 1
      %p71 = por %p69, %p70
      %p72 = scmp.ne.s32.totalorder %s64, %s67
      %p73 = scmp.eq.s32.totalorder %s12, 0
      %p74 = por %p72, %p73
      %p75 = scmp.ne.s32.totalorder %s64, %s67
      %p76 = scmp.eq.s32.totalorder %s17, 1
      %p77 = por %p75, %p76
      %p78 = scmp.ne.s32.totalorder %s67, %s68
      %p79 = scmp.eq.s32.totalorder %s17, 0
      %p80 = por %p78, %p79
      %p81 = scmp.ne.s32.totalorder %s67, %s68
      %p82 = scmp.eq.s32.totalorder %s18, 1
      %p83 = por %p81, %p82
      %p85 = scmp.ne.s32.totalorder %s68, %s84
      %p86 = scmp.eq.s32.totalorder %s18, 0
      %p87 = por %p85, %p86
      %s89 = sadd.s32 %s88, 1
      %p92 = scmp.eq.s32.totalorder %s12, 1
      %p93 = scmp.ne.s32.totalorder %s88, %s90
      %p94 = scmp.eq.s32.totalorder %s12, 0
      %p95 = por %p93, %p94
      %p96 = scmp.ne.s32.totalorder %s88, %s90
      %p97 = scmp.eq.s32.totalorder %s17, 1
      %p98 = por %p96, %p97
      %p99 = scmp.ne.s32.totalorder %s90, %s91
      %p100 = scmp.eq.s32.totalorder %s17, 0
      %p101 = por %p99, %p100
      %p102 = scmp.ne.s32.totalorder %s90, %s91
      %p103 = scmp.eq.s32.totalorder %s18, 1
      %p104 = por %p102, %p103
      %p106 = scmp.ne.s32.totalorder %s91, %s105
      %p107 = scmp.eq.s32.totalorder %s18, 0
      %p108 = por %p106, %p107
      %s109 = ssub.s32 %s19, %s31
      %p110 = scmp.eq.s32.totalorder %s109, 0
      %s112 = sadd.s32 %s111, 1
      %s113 = scalar_select %p110, %s111, %s112
      %p116 = pneg %p110
      %p117 = scmp.eq.s32.totalorder %s12, 1
      %p118 = por %p116, %p117
      %p119 = scmp.ne.s32.totalorder %s111, %s114
      %p120 = scmp.eq.s32.totalorder %s12, 0
      %p121 = por %p119, %p120
      %p122 = scmp.ne.s32.totalorder %s111, %s114
      %p123 = scmp.eq.s32.totalorder %s17, 1
      %p124 = por %p122, %p123
      %p125 = scmp.ne.s32.totalorder %s114, %s115
      %p126 = scmp.eq.s32.totalorder %s17, 0
      %p127 = por %p125, %p126
      %p128 = scmp.ne.s32.totalorder %s114, %s115
      %p129 = scmp.eq.s32.totalorder %s18, 1
      %p130 = por %p128, %p129
      %p132 = scmp.ne.s32.totalorder %s115, %s131
      %p133 = scmp.eq.s32.totalorder %s18, 0
      %p134 = por %p132, %p133
      %p135 = scmp.le.s32.totalorder 1, %s12
      %p136 = scmp.lt.s32.totalorder %s12, 3
      %p137 = pnand %p135, %p136
      %p138 = pneg %p137
      // Predicated region
      $region9: #{tpu_custom_call.1} parent=5 // pred_check
        _
      $region10: #{tpu_custom_call.1} parent=5 // pred_check_branch
        %140 = sbr.rel (%p137) target = $region12
      $region11: #{tpu_custom_call.1} parent=5 // pred_region
        %s141 = ssub.s32 %s12, 1
        // Predicated region
        $region13: #{tpu_custom_call.1} parent=11 // pred_check
          %p142 = pneg %p101
        $region14: #{tpu_custom_call.1} parent=11 // pred_check_branch
          %144 = sbr.rel (%p142) target = $region16
        $region15: #{tpu_custom_call.1} parent=11 // pred_region
          _
        $region16: #{tpu_custom_call.1} parent=11 // pred_fallthru
          _
      $region12: #{tpu_custom_call.1} parent=5 // pred_fallthru
        _
      %p145 = scmp.lt.s32.totalorder %s12, 2
      // Predicated region
      $region17: #{tpu_custom_call.1} parent=5 // pred_check
        %p146 = pneg %p145
      $region18: #{tpu_custom_call.1} parent=5 // pred_check_branch
        %148 = sbr.rel (%p146) target = $region20
      $region19: #{tpu_custom_call.1} parent=5 // pred_region
        // Predicated region
        $region21: #{tpu_custom_call.1} parent=19 // pred_check
          %p149 = pneg %p46
        $region22: #{tpu_custom_call.1} parent=19 // pred_check_branch
          %151 = sbr.rel (%p149) target = $region24
        $region23: #{tpu_custom_call.1} parent=19 // pred_region
          %s152 = smul.u32 32, %s20
          %p153 = scmp.lt.s32.totalorder %s19, 1
          %s154 = scalar_select %p153, %s19, 1
          %p155 = scmp.lt.s32.totalorder %s152, 31
          %s156 = scalar_select %p155, %s152, 31
          %s157 = smul.addr %s154, 32
          %s158 = sadd.s32 %s156, %s157
          %s159 = smul.addr %s158, 8
          %s160 = scalar_lea.vmem %s0, %s159
          %s161 = smul.u32 32, %s20
        $region24: #{tpu_custom_call.1} parent=19 // pred_fallthru
          _
        // Predicated region
        $region25: #{tpu_custom_call.1} parent=19 // pred_check
          %p162 = pneg %p74
        $region26: #{tpu_custom_call.1} parent=19 // pred_check_branch
          %164 = sbr.rel (%p162) target = $region28
        $region27: #{tpu_custom_call.1} parent=19 // pred_region
          %s165 = smul.u32 2, %s20
          %p166 = scmp.lt.s32.totalorder %s19, 1
          %s167 = scalar_select %p166, %s19, 1
          %p168 = scmp.lt.s32.totalorder %s165, 1
          %s169 = scalar_select %p168, %s165, 1
          %s170 = smul.addr %s167, 2
          %s171 = sadd.s32 %s169, %s170
          %s172 = scalar_lea.vmem %s1, %s171
          %s173 = smul.u32 2, %s20
        $region28: #{tpu_custom_call.1} parent=19 // pred_fallthru
          _
      $region20: #{tpu_custom_call.1} parent=5 // pred_fallthru
        _
      %p174 = scmp.le.s32.totalorder 1, %s12
      %p175 = scmp.lt.s32.totalorder %s12, 3
      %p176 = pnand %p174, %p175
      %p177 = pneg %p176
      // Predicated region
      $region29: #{tpu_custom_call.1} parent=5 // pred_check
        _
      $region30: #{tpu_custom_call.1} parent=5 // pred_check_branch
        %179 = sbr.rel (%p176) target = $region32
      $region31: #{tpu_custom_call.1} parent=5 // pred_region
        %s180 = ssub.s32 %s12, 1
        %s181 = smul.u32 32, %s22
        %p182 = scmp.lt.s32.totalorder %s21, 1
        %s183 = scalar_select %p182, %s21, 1
        %p184 = scmp.lt.s32.totalorder %s181, 31
        %s185 = scalar_select %p184, %s181, 31
        %s186 = smul.addr %s183, 32
        %s187 = sadd.s32 %s185, %s186
        %s188 = smul.addr %s187, 8
        %s189 = scalar_lea.vmem %s0, %s188
        %p190 = pneg %p52
        %p191 = pneg %p49
        %s192 = smul.u32 2, %s22
        %p193 = scmp.lt.s32.totalorder %s21, 1
        %s194 = scalar_select %p193, %s21, 1
        %p195 = scmp.lt.s32.totalorder %s192, 1
        %s196 = scalar_select %p195, %s192, 1
        %s197 = smul.addr %s194, 2
        %s198 = sadd.s32 %s196, %s197
        %s199 = scalar_lea.vmem %s1, %s198
        %p200 = pneg %p80
        %p201 = pneg %p77
        %p202 = pneg %p101
        %p203 = pneg %p98
        %p204 = pneg %p127
        %p205 = pneg %p124
        %s206 = sand.u32 %s114, 1
        %s207 = scalar_lea.sflag [#allocation4], %s206
        %s208 = sand.u32 %s114, 1
        %s209 = scalar_lea.vmem [#allocation3], %s208
        %s210 = smul.u32 32, %s22
        %p211 = scmp.lt.s32.totalorder %s21, 1
        %s212 = scalar_select %p211, %s21, 1
        %p213 = scmp.lt.s32.totalorder %s210, 31
        %s214 = scalar_select %p213, %s210, 31
        %s215 = smul.addr %s212, 32
        %s216 = sadd.s32 %s214, %s215
        %s217 = smul.addr %s216, 8
        %s218 = scalar_lea.vmem %s0, %s217
        %s219 = smul.u32 32, %s22
        %s220 = smul.u32 2, %s22
        %p221 = scmp.lt.s32.totalorder %s21, 1
        %s222 = scalar_select %p221, %s21, 1
        %p223 = scmp.lt.s32.totalorder %s220, 1
        %s224 = scalar_select %p223, %s220, 1
        %s225 = smul.addr %s222, 2
        %s226 = sadd.s32 %s224, %s225
        %s227 = scalar_lea.vmem %s1, %s226
        %s228 = smul.u32 2, %s22
        %v229 = vld [vmem:[%s218] sm:$0xff]
        %v230 = vld [vmem:[%s218 + $0x8] sm:$0xff]
        %v231 = vld [vmem:[%s218 + $0x10] sm:$0xff]
        %v232 = vld [vmem:[%s218 + $0x18] sm:$0xff]
        %v233 = vld [vmem:[%s218 + $0x20] sm:$0xff]
        %v234 = vld [vmem:[%s218 + $0x28] sm:$0xff]
        %v235 = vld [vmem:[%s218 + $0x30] sm:$0xff]
        %v236 = vld [vmem:[%s218 + $0x38] sm:$0xff]
        %v237 = vld [vmem:[%s218 + $0x40] sm:$0xff]
        %v238 = vld [vmem:[%s218 + $0x48] sm:$0xff]
        %v239 = vld [vmem:[%s218 + $0x50] sm:$0xff]
        %v240 = vld [vmem:[%s218 + $0x58] sm:$0xff]
        %v241 = vld [vmem:[%s218 + $0x60] sm:$0xff]
        %v242 = vld [vmem:[%s218 + $0x68] sm:$0xff]
        %v243 = vld [vmem:[%s218 + $0x70] sm:$0xff]
        %v244 = vld [vmem:[%s218 + $0x78] sm:$0xff]
        %v245 = vld [vmem:[%s218 + $0x80] sm:$0xff]
        %v246 = vld [vmem:[%s218 + $0x88] sm:$0xff]
        %v247 = vld [vmem:[%s218 + $0x90] sm:$0xff]
        %v248 = vld [vmem:[%s218 + $0x98] sm:$0xff]
        %v249 = vld [vmem:[%s218 + $0xa0] sm:$0xff]
        %v250 = vld [vmem:[%s218 + $0xa8] sm:$0xff]
        %v251 = vld [vmem:[%s218 + $0xb0] sm:$0xff]
        %v252 = vld [vmem:[%s218 + $0xb8] sm:$0xff]
        %v253 = vld [vmem:[%s218 + $0xc0] sm:$0xff]
        %v254 = vld [vmem:[%s218 + $0xc8] sm:$0xff]
        %v255 = vld [vmem:[%s218 + $0xd0] sm:$0xff]
        %v256 = vld [vmem:[%s218 + $0xd8] sm:$0xff]
        %v257 = vld [vmem:[%s218 + $0xe0] sm:$0xff]
        %v258 = vld [vmem:[%s218 + $0xe8] sm:$0xff]
        %v259 = vld [vmem:[%s218 + $0xf0] sm:$0xff]
        %v260 = vld [vmem:[%s218 + $0xf8] sm:$0xff]
        %261 = vxpose.xlu0.b32.start [1/16] %v229, 128
        %262 = vxpose.xlu0.b32.cont [2/16] %v230, 128
        %263 = vxpose.xlu0.b32.cont [3/16] %v231, 128
        %264 = vxpose.xlu0.b32.cont [4/16] %v232, 128
        %265 = vxpose.xlu0.b32.cont [5/16] %v233, 128
        %266 = vxpose.xlu0.b32.cont [6/16] %v234, 128
        %267 = vxpose.xlu0.b32.cont [7/16] %v235, 128
        %268 = vxpose.xlu0.b32.cont [8/16] %v236, 128
        %269 = vxpose.xlu0.b32.cont [9/16] %v237, 128
        %270 = vxpose.xlu0.b32.cont [10/16] %v238, 128
        %271 = vxpose.xlu0.b32.cont [11/16] %v239, 128
        %272 = vxpose.xlu0.b32.cont [12/16] %v240, 128
        %273 = vxpose.xlu0.b32.cont [13/16] %v241, 128
        %274 = vxpose.xlu0.b32.cont [14/16] %v242, 128
        %275 = vxpose.xlu0.b32.cont [15/16] %v243, 128
        %276 = vxpose.xlu0.b32.end [16/16] %v244, 128
        %v277 = vpop.trf.xlu0
        %v278 = vpop.trf.xlu0
        %v279 = vpop.trf.xlu0
        %v280 = vpop.trf.xlu0
        %v281 = vpop.trf.xlu0
        %v282 = vpop.trf.xlu0
        %v283 = vpop.trf.xlu0
        %v284 = vpop.trf.xlu0
        %v285 = vpop.trf.xlu0
        %v286 = vpop.trf.xlu0
        %v287 = vpop.trf.xlu0
        %v288 = vpop.trf.xlu0
        %v289 = vpop.trf.xlu0
        %v290 = vpop.trf.xlu0
        %v291 = vpop.trf.xlu0
        %v292 = vpop.trf.xlu0
        %293 = vxpose.xlu0.b32.start [1/16] %v245, 128
        %294 = vxpose.xlu0.b32.cont [2/16] %v246, 128
        %295 = vxpose.xlu0.b32.cont [3/16] %v247, 128
        %296 = vxpose.xlu0.b32.cont [4/16] %v248, 128
        %297 = vxpose.xlu0.b32.cont [5/16] %v249, 128
        %298 = vxpose.xlu0.b32.cont [6/16] %v250, 128
        %299 = vxpose.xlu0.b32.cont [7/16] %v251, 128
        %300 = vxpose.xlu0.b32.cont [8/16] %v252, 128
        %301 = vxpose.xlu0.b32.cont [9/16] %v253, 128
        %302 = vxpose.xlu0.b32.cont [10/16] %v254, 128
        %303 = vxpose.xlu0.b32.cont [11/16] %v255, 128
        %304 = vxpose.xlu0.b32.cont [12/16] %v256, 128
        %305 = vxpose.xlu0.b32.cont [13/16] %v257, 128
        %306 = vxpose.xlu0.b32.cont [14/16] %v258, 128
        %307 = vxpose.xlu0.b32.cont [15/16] %v259, 128
        %308 = vxpose.xlu0.b32.end [16/16] %v260, 128
        %v309 = vpop.trf.xlu0
        %v310 = vpop.trf.xlu0
        %v311 = vpop.trf.xlu0
        %v312 = vpop.trf.xlu0
        %v313 = vpop.trf.xlu0
        %v314 = vpop.trf.xlu0
        %v315 = vpop.trf.xlu0
        %v316 = vpop.trf.xlu0
        %v317 = vpop.trf.xlu0
        %v318 = vpop.trf.xlu0
        %v319 = vpop.trf.xlu0
        %v320 = vpop.trf.xlu0
        %v321 = vpop.trf.xlu0
        %v322 = vpop.trf.xlu0
        %v323 = vpop.trf.xlu0
        %v324 = vpop.trf.xlu0
        %v325 = vrot.slane %v277, 4
        %v326 = vmax.f32 %v277, %v325
        %v327 = vrot.slane %v326, 2
        %v328 = vmax.f32 %v326, %v327
        %v329 = vrot.slane %v328, 1
        %v330 = vmax.f32 %v328, %v329
        %v331 = vrot.slane %v309, 4
        %v332 = vmax.f32 %v309, %v331
        %v333 = vrot.slane %v332, 2
        %v334 = vmax.f32 %v332, %v333
        %v335 = vrot.slane %v334, 1
        %v336 = vmax.f32 %v334, %v335
        %v337 = vsub.f32 %v277, %v330
        %v338 = vsub.f32 %v309, %v336
        %v339 = vmul.f32 %v337, 1.442695
        %v340 = vpow.pop %v339
        %v341 = vmul.f32 %v338, 1.442695
        %v342 = vpow.pop %v341
        %v343 = vrot.slane %v340, 4
        %v344 = vadd.f32 %v340, %v343
        %v345 = vrot.slane %v344, 2
        %v346 = vadd.f32 %v344, %v345
        %v347 = vrot.slane %v346, 1
        %v348 = vadd.f32 %v346, %v347
        %v349 = vrot.slane %v342, 4
        %v350 = vadd.f32 %v342, %v349
        %v351 = vrot.slane %v350, 2
        %v352 = vadd.f32 %v350, %v351
        %v353 = vrot.slane %v352, 1
        %v354 = vadd.f32 %v352, %v353
        %v355 = vlog2.pop %v348
        %v356 = vmul.f32 %v355, 0.6931472
        %v357 = vlog2.pop %v354
        %v358 = vmul.f32 %v357, 0.6931472
        %v359 = vsub.f32 %v337, %v356
        %v360 = vsub.f32 %v338, %v358
        %v361 = vlaneseq
        %v362 = vand.u32 %v361, 127
        %v363 = vadd.s32 %v362, 128
        %p364 = scmp.gt.s32.totalorder %s22, 0
        %v365 = vld [vmem:[#allocation2] sm:$0xff]
        %s366 = scalar_select %p364, 1, 0
        %v367 = vstv %s366
        %vm368 = vcmp.eq.s32.totalorder %v367, 1
        %v369 = vsel %vm368, %v365, %v359
        %370 = vrot.lane.b32.xlu0 %v359, 1
        %v371 = vpop.permute.xlu0 %370
        %372 = vrot.lane.b32.xlu0 %v360, 1
        %v373 = vpop.permute.xlu0 %372
        %vm374 = vcmp.lt.s32.totalorder %v362, 1
        %v375 = vsel %vm374, %v371, %v373
        %v376 = vsel %vm374, %v373, %v371
        %vm377 = vcmp.eq.s32.totalorder %v362, 0
        %vm378 = vcmp.eq.s32.totalorder %v363, 0
        %v379 = vsel %vm377, 1, 0
        %v380 = vsel %vm378, 1, 0
        %vm381 = vcmp.eq.s32.totalorder %v379, 1
        %vm382 = vcmp.eq.s32.totalorder %v380, 1
        %384 = vset.pattern.permute.xlu0 0
        %385 = vperm.xlu0 %384, %v369
        %v386 = vpop.permute.xlu0 %385
        %v388 = vsel %vm381, %v386, %v376
        %v389 = vsel %vm382, %v386, %v375
        %v390 = vsub.f32 %v359, %v388
        %v391 = vsub.f32 %v360, %v389
        %v392 = vmul.f32 %v390, %v390
        %v393 = vmul.f32 %v391, %v391
        %v394 = vmin.f32 %v392, 160.0
        %v395 = vmin.f32 %v393, 160.0
        %397 = vrot.lane.b32.xlu0 %v360, 1
        %v398 = vpop.permute.xlu0 %397
        %vm400 = vcmask 7168
        %401 = vst.msk [vmem:[#allocation2] sm:$0xff] %vm400, %v398
        %v402 = vld [vmem:[%s227] sm:$0x3]
        %v403 = vlaneseq
        %v404 = vshrl.u32 %v403, 7
        %v405 = vlaneseq
        %v406 = vshrl.u32 %v405, 7
        %v407 = vsub.s32 0, %v406
        %v408 = vrot.slane %v402, %v407
        %v409 = vlaneseq
        %v410 = vshrl.u32 %v409, 7
        %v411 = vsub.s32 1, %v410
        %v412 = vrot.slane %v402, %v411
        %vm413 = vcmp.eq.s32.totalorder %v404, %v408
        %vm414 = vcmp.eq.s32.totalorder %v404, %v412
        %v415 = vld [vmem:[%s2] sm:$0xff]
        %417 = vset.pattern.permute.xlu0 0
        %418 = vperm.xlu0 %417, %v415
        %v419 = vpop.permute.xlu0 %418
        %v421 = vmul.f32 %v419, %v359
        %v422 = vmul.f32 %v419, %v360
        %v423 = vsel %vm413, %v421, 0.0
        %v424 = vsel %vm414, %v422, 0.0
        %v425 = vadd.f32 %v423, %v424
        %426 = vadd.xlane.f32.xlu0 %v425
        %v427 = vpop.xlane.xlu0 %426
        %v428 = vrot.slane %v427, 4
        %v429 = vadd.f32 %v427, %v428
        %v430 = vrot.slane %v429, 2
        %v431 = vadd.f32 %v429, %v430
        %v432 = vrot.slane %v431, 1
        %v433 = vadd.f32 %v431, %v432
        %s434 = vtos %v433
        %s435 = ssub.f32 0.0, %s434
        %v436 = vsel %vm413, %v419, 0.0
        %v437 = vsel %vm414, %v419, 0.0
        %v438 = vadd.f32 %v436, %v437
        %439 = vadd.xlane.f32.xlu0 %v438
        %v440 = vpop.xlane.xlu0 %439
        %v441 = vrot.slane %v440, 4
        %v442 = vadd.f32 %v440, %v441
        %v443 = vrot.slane %v442, 2
        %v444 = vadd.f32 %v442, %v443
        %v445 = vrot.slane %v444, 1
        %v446 = vadd.f32 %v444, %v445
        %s447 = vtos %v446
        %v448 = vadd.f32 %v394, %v395
        %449 = vadd.xlane.f32.xlu0 %v448
        %v450 = vpop.xlane.xlu0 %449
        %v451 = vrot.slane %v450, 4
        %v452 = vadd.f32 %v450, %v451
        %v453 = vrot.slane %v452, 2
        %v454 = vadd.f32 %v452, %v453
        %v455 = vrot.slane %v454, 1
        %v456 = vadd.f32 %v454, %v455
        %s457 = vtos %v456
        %v458 = vstv %s435
        %v459 = vsel %vm377, %v458, 0.0
        %vm460 = vcmp.eq.s32.totalorder %v362, 1
        %v461 = vstv %s447
        %v462 = vsel %vm460, %v461, 0.0
        %v463 = vadd.f32 %v459, %v462
        %vm464 = vcmp.eq.s32.totalorder %v362, 2
        %v465 = vstv %s457
        %v466 = vsel %vm464, %v465, 0.0
        %v467 = vadd.f32 %v463, %v466
        %p468 = scmp.eq.s32.totalorder %s22, 0
        // Predicated region
        $region33: #{tpu_custom_call.1} parent=31 // pred_check
          %p469 = pneg %p468
        $region34: #{tpu_custom_call.1} parent=31 // pred_check_branch
          %471 = sbr.rel (%p469) target = $region36
        $region35: #{tpu_custom_call.1} parent=31 // pred_region
          %472 = vst [vmem:[%s209] sm:$0x1] 0.0
        $region36: #{tpu_custom_call.1} parent=31 // pred_fallthru
          _
        %v473 = vld [vmem:[%s209] sm:$0x1]
        %v474 = vadd.f32 %v473, %v467
        %475 = vst [vmem:[%s209] sm:$0x1] %v474
        %s476 = sand.u32 %s114, 1
        %s477 = scalar_lea.sflag [#allocation4], %s476
        %s478 = sand.u32 %s114, 1
        %s479 = scalar_lea.vmem [#allocation3], %s478
        // Predicated region
        $region37: #{tpu_custom_call.1} parent=31 // pred_check
          %p480 = pneg %p124
        $region38: #{tpu_custom_call.1} parent=31 // pred_check_branch
          %482 = sbr.rel (%p480) target = $region40
        $region39: #{tpu_custom_call.1} parent=31 // pred_region
          %s484 = ssub.s32 16, 16
          %485 = vsyncadd %s477, %s484
          %s486 = smul.addr %s21, 16
          %s487 = scalar_lea.hbm %s3, %s486
          %s489 = sshll.u32 %s479, 4
          %s490 = int_to_ptr.vmem [resolvable:$true] %s489
          %492 = dma.vmem_to_hbm [thread:$0]  %s490, 16, %s487, %s477
        $region40: #{tpu_custom_call.1} parent=31 // pred_fallthru
          _
      $region32: #{tpu_custom_call.1} parent=5 // pred_fallthru
        _
      %p493 = scmp.le.s32.totalorder 2, %s12
      // Predicated region
      $region41: #{tpu_custom_call.1} parent=5 // pred_check
        %p494 = pneg %p493
      $region42: #{tpu_custom_call.1} parent=5 // pred_check_branch
        %496 = sbr.rel (%p494) target = $region44
      $region43: #{tpu_custom_call.1} parent=5 // pred_region
        %s497 = ssub.s32 %s12, 2
        // Predicated region
        $region45: #{tpu_custom_call.1} parent=43 // pred_check
          %p498 = pneg %p130
        $region46: #{tpu_custom_call.1} parent=43 // pred_check_branch
          %500 = sbr.rel (%p498) target = $region48
        $region47: #{tpu_custom_call.1} parent=43 // pred_region
          %s501 = sand.u32 %s115, 1
          %s502 = scalar_lea.sflag [#allocation4], %s501
          %s503 = sand.u32 %s115, 1
          %s504 = scalar_lea.vmem [#allocation3], %s503
          %505 = dma.done %s502, 16
        $region48: #{tpu_custom_call.1} parent=43 // pred_fallthru
          _
      $region44: #{tpu_custom_call.1} parent=5 // pred_fallthru
        _
    $region6: #{tpu_custom_call.1} parent=1 // loop_footer
      %s16 = sadd.s32 1, %s12
    $region7: #{tpu_custom_call.1} parent=1 // loop_footer_branch
      %11 = sbr.rel target = $region3
    $region8: #{tpu_custom_call.1} parent=1 // loop_exit
      _
    %506 = vsyncpa [#allocation4], 1
    %s507 = scalar_lea.sflag [#allocation4], 1
    %508 = vsyncpa %s507, 1

</llo_original>
